<compile_context>
chip_gen: v6e
topology: v6e:2x2x1
jax: 0.10.0
libtpu: 0.0.40
codegen_flags: <defaults>
</compile_context>

<pallas_src>
import jax
import jax.numpy as jnp
from jax.experimental import pallas as pl
from jax.experimental.pallas import tpu as pltpu

# Module-consistent sizes (ratio=16 requires C >= 16).
B, C, H, W = 2, 32, 16, 16
HW = H * W                 # 256 -> lane-dense last dim
RATIO = 16
HID = C // RATIO           # 2


def channel_attention_kernel(x_ref, w1_ref, w2_ref, out_ref):
    # x_ref: [B, C, HW] (HW = 256, lane-dense); w1_ref: [HID, C]; w2_ref: [C, HID].
    x = x_ref[...]                                   # [B, C, HW] f32
    w1 = w1_ref[...]                                 # [HID, C]
    w2 = w2_ref[...]                                 # [C, HID]

    # Spatial pooling (AdaptiveMaxPool2d(1) / AdaptiveAvgPool2d(1)).
    mx = jnp.max(x, axis=-1)                         # [B, C]
    av = jnp.sum(x, axis=-1) * (1.0 / HW)            # [B, C]

    def shared_mlp(v):
        # fc2(relu(fc1(v))) without bias, kept on the VPU/XLU (no MXU matmul):
        # statically unrolled over the HID hidden units.
        out = jnp.zeros_like(v)                      # [B, C]
        for j in range(HID):
            hj = jnp.sum(v * w1[j][None, :], axis=-1, keepdims=True)  # [B, 1]
            hj = jnp.maximum(hj, 0.0)                                  # ReLU
            out = out + hj * w2[:, j][None, :]                         # [B, C]
        return out

    gate = jax.nn.sigmoid(shared_mlp(mx) + shared_mlp(av))            # [B, C]

    out_ref[...] = (x * gate[:, :, None]).astype(out_ref.dtype)       # [B, C, HW]


def channel_attention_pallas(x, w1, w2):
    b, c, h, w = x.shape
    xr = x.reshape(b, c, h * w)                      # lane-dense [B, C, 256]
    out = pl.pallas_call(
        channel_attention_kernel,
        out_shape=jax.ShapeDtypeStruct(xr.shape, x.dtype),
        grid=(1,),                                   # single step: whole tensor fits VMEM
        in_specs=[
            pl.BlockSpec((b, c, h * w), lambda i: (0, 0, 0)),
            pl.BlockSpec((HID, c), lambda i: (0, 0)),
            pl.BlockSpec((c, HID), lambda i: (0, 0)),
        ],
        out_specs=pl.BlockSpec((b, c, h * w), lambda i: (0, 0, 0)),
    )(xr, w1, w2)
    return out.reshape(b, c, h, w)


def channel_attention_ref(x, w1, w2):
    # Pure-JAX reference mirroring the PyTorch forward exactly.
    mx = jnp.max(x, axis=(2, 3))                     # [B, C]
    av = jnp.mean(x, axis=(2, 3))                    # [B, C]

    def fc(v):
        return jnp.maximum(v @ w1.T, 0.0) @ w2.T     # Linear->ReLU->Linear, no bias

    gate = jax.nn.sigmoid(fc(mx) + fc(av))[:, :, None, None]
    return gate * x


if __name__ == "__main__":
    key = jax.random.PRNGKey(0)
    kx, k1, k2 = jax.random.split(key, 3)

    x = jax.random.normal(kx, (B, C, H, W), dtype=jnp.float32)
    # PyTorch Linear weights (bias=False): fc1 [C//r, C], fc2 [C, C//r].
    w1 = 0.2 * jax.random.normal(k1, (HID, C), dtype=jnp.float32)
    w2 = 0.2 * jax.random.normal(k2, (C, HID), dtype=jnp.float32)

    out = channel_attention_pallas(x, w1, w2)
    out = jax.block_until_ready(out)

    ref = channel_attention_ref(x, w1, w2)
    err = float(jnp.max(jnp.abs(out - ref)))
    assert err < 1e-5, f"mismatch vs reference: {err}"
    print("KERNEL_OK")
</pallas_src>

<mosaic_0001>
module attributes {stable_mosaic.version = 11 : i64} {
  func.func @channel_attention_kernel(%arg0: i32, %arg1: memref<2x32x256xf32, #tpu.memory_space<vmem>>, %arg2: memref<2x32xf32, #tpu.memory_space<vmem>>, %arg3: memref<32x2xf32, #tpu.memory_space<vmem>>, %arg4: memref<2x32x256xf32, #tpu.memory_space<vmem>>) attributes {dimension_semantics = [#tpu.dimension_semantics<arbitrary>], iteration_bounds = array<i64: 1>, scalar_prefetch = 0 : i64, scratch_operands = 0 : i64, tpu.core_type = #tpu.core_type<tc>, window_params = [{pipeline_mode = #tpu.pipeline_mode<synchronous>, transform_indices = @transform_0, window_bounds = array<i64: 2, 32, 256>}, {pipeline_mode = #tpu.pipeline_mode<synchronous>, transform_indices = @transform_1, window_bounds = array<i64: 2, 32>}, {pipeline_mode = #tpu.pipeline_mode<synchronous>, transform_indices = @transform_2, window_bounds = array<i64: 32, 2>}, {pipeline_mode = #tpu.pipeline_mode<synchronous>, transform_indices = @transform_3, window_bounds = array<i64: 2, 32, 256>}]} {
    %c0 = arith.constant 0 : index
    %c0_0 = arith.constant 0 : index
    %c0_1 = arith.constant 0 : index
    %0 = vector.load %arg1[%c0, %c0_0, %c0_1] : memref<2x32x256xf32, #tpu.memory_space<vmem>>, vector<2x32x256xf32>
    %c0_2 = arith.constant 0 : index
    %c0_3 = arith.constant 0 : index
    %1 = vector.load %arg2[%c0_2, %c0_3] : memref<2x32xf32, #tpu.memory_space<vmem>>, vector<2x32xf32>
    %c0_4 = arith.constant 0 : index
    %c0_5 = arith.constant 0 : index
    %2 = vector.load %arg3[%c0_4, %c0_5] : memref<32x2xf32, #tpu.memory_space<vmem>>, vector<32x2xf32>
    %cst = arith.constant dense<0xFF800000> : vector<2x32xf32>
    %3 = vector.multi_reduction <maximumf>, %0, %cst [2] : vector<2x32x256xf32> to vector<2x32xf32>
    %cst_6 = arith.constant dense<0.000000e+00> : vector<2x32xf32>
    %4 = vector.multi_reduction <add>, %0, %cst_6 [2] : vector<2x32x256xf32> to vector<2x32xf32>
    %cst_7 = arith.constant 3.906250e-03 : f32
    %5 = vector.broadcast %cst_7 : f32 to vector<2x32xf32>
    %6 = arith.mulf %4, %5 : vector<2x32xf32>
    %cst_8 = arith.constant 0.000000e+00 : f32
    %7 = vector.broadcast %cst_8 : f32 to vector<2x32xf32>
    %8 = vector.extract_strided_slice %1 {offsets = [0, 0], sizes = [1, 32], strides = [1, 1]} : vector<2x32xf32> to vector<1x32xf32>
    %9 = vector.shape_cast %8 : vector<1x32xf32> to vector<32xf32>
    %10 = vector.shape_cast %9 : vector<32xf32> to vector<1x32xf32>
    %11 = vector.broadcast %10 : vector<1x32xf32> to vector<2x32xf32>
    %12 = arith.mulf %3, %11 : vector<2x32xf32>
    %cst_9 = arith.constant dense<0.000000e+00> : vector<2xf32>
    %13 = vector.multi_reduction <add>, %12, %cst_9 [1] : vector<2x32xf32> to vector<2xf32>
    %14 = vector.shape_cast %13 : vector<2xf32> to vector<2x1xf32>
    %cst_10 = arith.constant 0.000000e+00 : f32
    %15 = vector.broadcast %cst_10 : f32 to vector<2x1xf32>
    %16 = arith.maximumf %14, %15 : vector<2x1xf32>
    %17 = vector.extract_strided_slice %2 {offsets = [0, 0], sizes = [32, 1], strides = [1, 1]} : vector<32x2xf32> to vector<32x1xf32>
    %18 = vector.shape_cast %17 : vector<32x1xf32> to vector<32xf32>
    %19 = vector.shape_cast %18 : vector<32xf32> to vector<1x32xf32>
    %20 = vector.broadcast %16 : vector<2x1xf32> to vector<2x32xf32>
    %21 = vector.broadcast %19 : vector<1x32xf32> to vector<2x32xf32>
    %22 = arith.mulf %20, %21 : vector<2x32xf32>
    %23 = arith.addf %7, %22 : vector<2x32xf32>
    %24 = vector.extract_strided_slice %1 {offsets = [1, 0], sizes = [1, 32], strides = [1, 1]} : vector<2x32xf32> to vector<1x32xf32>
    %25 = vector.shape_cast %24 : vector<1x32xf32> to vector<32xf32>
    %26 = vector.shape_cast %25 : vector<32xf32> to vector<1x32xf32>
    %27 = vector.broadcast %26 : vector<1x32xf32> to vector<2x32xf32>
    %28 = arith.mulf %3, %27 : vector<2x32xf32>
    %cst_11 = arith.constant dense<0.000000e+00> : vector<2xf32>
    %29 = vector.multi_reduction <add>, %28, %cst_11 [1] : vector<2x32xf32> to vector<2xf32>
    %30 = vector.shape_cast %29 : vector<2xf32> to vector<2x1xf32>
    %cst_12 = arith.constant 0.000000e+00 : f32
    %31 = vector.broadcast %cst_12 : f32 to vector<2x1xf32>
    %32 = arith.maximumf %30, %31 : vector<2x1xf32>
    %33 = vector.extract_strided_slice %2 {offsets = [0, 1], sizes = [32, 1], strides = [1, 1]} : vector<32x2xf32> to vector<32x1xf32>
    %34 = vector.shape_cast %33 : vector<32x1xf32> to vector<32xf32>
    %35 = vector.shape_cast %34 : vector<32xf32> to vector<1x32xf32>
    %36 = vector.broadcast %32 : vector<2x1xf32> to vector<2x32xf32>
    %37 = vector.broadcast %35 : vector<1x32xf32> to vector<2x32xf32>
    %38 = arith.mulf %36, %37 : vector<2x32xf32>
    %39 = arith.addf %23, %38 : vector<2x32xf32>
    %cst_13 = arith.constant 0.000000e+00 : f32
    %40 = vector.broadcast %cst_13 : f32 to vector<2x32xf32>
    %41 = vector.extract_strided_slice %1 {offsets = [0, 0], sizes = [1, 32], strides = [1, 1]} : vector<2x32xf32> to vector<1x32xf32>
    %42 = vector.shape_cast %41 : vector<1x32xf32> to vector<32xf32>
    %43 = vector.shape_cast %42 : vector<32xf32> to vector<1x32xf32>
    %44 = vector.broadcast %43 : vector<1x32xf32> to vector<2x32xf32>
    %45 = arith.mulf %6, %44 : vector<2x32xf32>
    %cst_14 = arith.constant dense<0.000000e+00> : vector<2xf32>
    %46 = vector.multi_reduction <add>, %45, %cst_14 [1] : vector<2x32xf32> to vector<2xf32>
    %47 = vector.shape_cast %46 : vector<2xf32> to vector<2x1xf32>
    %cst_15 = arith.constant 0.000000e+00 : f32
    %48 = vector.broadcast %cst_15 : f32 to vector<2x1xf32>
    %49 = arith.maximumf %47, %48 : vector<2x1xf32>
    %50 = vector.extract_strided_slice %2 {offsets = [0, 0], sizes = [32, 1], strides = [1, 1]} : vector<32x2xf32> to vector<32x1xf32>
    %51 = vector.shape_cast %50 : vector<32x1xf32> to vector<32xf32>
    %52 = vector.shape_cast %51 : vector<32xf32> to vector<1x32xf32>
    %53 = vector.broadcast %49 : vector<2x1xf32> to vector<2x32xf32>
    %54 = vector.broadcast %52 : vector<1x32xf32> to vector<2x32xf32>
    %55 = arith.mulf %53, %54 : vector<2x32xf32>
    %56 = arith.addf %40, %55 : vector<2x32xf32>
    %57 = vector.extract_strided_slice %1 {offsets = [1, 0], sizes = [1, 32], strides = [1, 1]} : vector<2x32xf32> to vector<1x32xf32>
    %58 = vector.shape_cast %57 : vector<1x32xf32> to vector<32xf32>
    %59 = vector.shape_cast %58 : vector<32xf32> to vector<1x32xf32>
    %60 = vector.broadcast %59 : vector<1x32xf32> to vector<2x32xf32>
    %61 = arith.mulf %6, %60 : vector<2x32xf32>
    %cst_16 = arith.constant dense<0.000000e+00> : vector<2xf32>
    %62 = vector.multi_reduction <add>, %61, %cst_16 [1] : vector<2x32xf32> to vector<2xf32>
    %63 = vector.shape_cast %62 : vector<2xf32> to vector<2x1xf32>
    %cst_17 = arith.constant 0.000000e+00 : f32
    %64 = vector.broadcast %cst_17 : f32 to vector<2x1xf32>
    %65 = arith.maximumf %63, %64 : vector<2x1xf32>
    %66 = vector.extract_strided_slice %2 {offsets = [0, 1], sizes = [32, 1], strides = [1, 1]} : vector<32x2xf32> to vector<32x1xf32>
    %67 = vector.shape_cast %66 : vector<32x1xf32> to vector<32xf32>
    %68 = vector.shape_cast %67 : vector<32xf32> to vector<1x32xf32>
    %69 = vector.broadcast %65 : vector<2x1xf32> to vector<2x32xf32>
    %70 = vector.broadcast %68 : vector<1x32xf32> to vector<2x32xf32>
    %71 = arith.mulf %69, %70 : vector<2x32xf32>
    %72 = arith.addf %56, %71 : vector<2x32xf32>
    %73 = arith.addf %39, %72 : vector<2x32xf32>
    %74 = arith.negf %73 : vector<2x32xf32>
    %75 = math.exp %74 : vector<2x32xf32>
    %cst_18 = arith.constant 1.000000e+00 : f32
    %76 = vector.broadcast %cst_18 : f32 to vector<2x32xf32>
    %77 = arith.addf %76, %75 : vector<2x32xf32>
    %78 = arith.divf %76, %77 : vector<2x32xf32>
    %79 = vector.shape_cast %78 : vector<2x32xf32> to vector<2x32x1xf32>
    %80 = vector.broadcast %79 : vector<2x32x1xf32> to vector<2x32x256xf32>
    %81 = arith.mulf %0, %80 : vector<2x32x256xf32>
    %c0_19 = arith.constant 0 : index
    %c0_20 = arith.constant 0 : index
    %c0_21 = arith.constant 0 : index
    %82 = vector.load %arg4[%c0_19, %c0_20, %c0_21] : memref<2x32x256xf32, #tpu.memory_space<vmem>>, vector<2x32x256xf32>
    tpu.vector_store %arg4[%c0_19, %c0_20, %c0_21], %81 {strides = array<i32>} : memref<2x32x256xf32, #tpu.memory_space<vmem>>, vector<2x32x256xf32>,
    return
  }
  func.func @transform_0(%arg0: i32) -> (i32, i32, i32) {
    %c0_i32 = arith.constant 0 : i32
    %c0_i32_0 = arith.constant 0 : i32
    %c0_i32_1 = arith.constant 0 : i32
    %c0_i32_2 = arith.constant 0 : i32
    return %c0_i32, %c0_i32_0, %c0_i32_1 : i32, i32, i32
  }
  func.func @transform_1(%arg0: i32) -> (i32, i32) {
    %c0_i32 = arith.constant 0 : i32
    %c0_i32_0 = arith.constant 0 : i32
    %c0_i32_1 = arith.constant 0 : i32
    return %c0_i32, %c0_i32_0 : i32, i32
  }
  func.func @transform_2(%arg0: i32) -> (i32, i32) {
    %c0_i32 = arith.constant 0 : i32
    %c0_i32_0 = arith.constant 0 : i32
    %c0_i32_1 = arith.constant 0 : i32
    return %c0_i32, %c0_i32_0 : i32, i32
  }
  func.func @transform_3(%arg0: i32) -> (i32, i32, i32) {
    %c0_i32 = arith.constant 0 : i32
    %c0_i32_0 = arith.constant 0 : i32
    %c0_i32_1 = arith.constant 0 : i32
    %c0_i32_2 = arith.constant 0 : i32
    return %c0_i32, %c0_i32_0, %c0_i32_1 : i32, i32, i32
  }
}

</mosaic_0001>

<llo_original>
// kernel: tpu_custom_call.1
$region0: #{tpu_custom_call.1}
  #allocation0 [shape = 'u32[]', space=smem, size = 0x4, offset = 0x4, fixed_abs, tag = 'smem constant byte address 0x4 - core index']
  #allocation1 [shape = 'u32[144,128]{1,0:T(1,128)}', space=vmem, size = 0x12000, scoped, tag = 'internal scratch']
  %s0 = inlined_call_operand.hbm [shape: f32[2,32,256], index: 0, kind: input, shape index: {}]
  %s1 = inlined_call_operand.vmem [shape: f32[2,32], index: 1, kind: input, shape index: {}]
  %s2 = inlined_call_operand.vmem [shape: f32[32,2], index: 2, kind: input, shape index: {}]
  %s3 = inlined_call_operand.hbm [shape: f32[2,32,256], index: 3, kind: output, shape index: {}]
  %s4 = sld [smem:[#allocation0]]
  $region26: #{tpu_custom_call.1} parent=0
    _
  %s6 = ssub.s32 1, %s4
  %s7 = scalar_select 0, %s6, %s4
  $region1: #{tpu_custom_call.1} parent=0
    #allocation2 [shape = 'u8[65536]{0}', space=vmem, size = 0x10000, scoped, tag = 'input window, operand 0, single buffered']
    #allocation3 [shape = 's32[1]{0}', space=sflag, size = 0x4, scoped, tag = 'scoped memory for tpu_custom_call.1']
    #allocation4 [shape = 's32[1]{0}', space=sflag, size = 0x4, scoped, tag = 'scoped memory for tpu_custom_call.1']
    #allocation5 [shape = 'u8[65536]{0}', space=vmem, size = 0x10000, scoped, tag = 'output window, operand 0, single buffered']
    %8 = vsyncpa [#allocation3], 0
    %9 = vsyncpa [#allocation4], 0
    // Predicated region
    $region2: #{tpu_custom_call.1} parent=1 // pred_check
      _
    $region3: #{tpu_custom_call.1} parent=1 // pred_check_branch
      %11 = sbr.rel (0) target = $region5
    $region4: #{tpu_custom_call.1} parent=1 // pred_region
      %s13 = ssub.s32 2048, 2048
      %14 = vsyncadd [#allocation3], %s13
      %s15 = sshll.u32 [#allocation2], 4
      %s16 = int_to_ptr.vmem [resolvable:$true] %s15
      %21 = dma.hbm_to_vmem [thread:$0]  %s0, 2048, %s16, [#allocation3], 256, 256, 16
    $region5: #{tpu_custom_call.1} parent=1 // pred_fallthru
      _
    // Predicated region
    $region6: #{tpu_custom_call.1} parent=1 // pred_check
      _
    $region7: #{tpu_custom_call.1} parent=1 // pred_check_branch
      %23 = sbr.rel (0) target = $region9
    $region8: #{tpu_custom_call.1} parent=1 // pred_region
      _
    $region9: #{tpu_custom_call.1} parent=1 // pred_fallthru
      _
    // Predicated region
    $region10: #{tpu_custom_call.1} parent=1 // pred_check
      _
    $region11: #{tpu_custom_call.1} parent=1 // pred_check_branch
      %25 = sbr.rel (0) target = $region13
    $region12: #{tpu_custom_call.1} parent=1 // pred_region
      _
    $region13: #{tpu_custom_call.1} parent=1 // pred_fallthru
      _
    // Predicated region
    $region14: #{tpu_custom_call.1} parent=1 // pred_check
      _
    $region15: #{tpu_custom_call.1} parent=1 // pred_check_branch
      %27 = sbr.rel (0) target = $region17
    $region16: #{tpu_custom_call.1} parent=1 // pred_region
      %28 = dma.done [#allocation3], 2048
    $region17: #{tpu_custom_call.1} parent=1 // pred_fallthru
      _
    %v29 = vld [vmem:[#allocation2] sm:$0xff]
    %v30 = vld [vmem:[#allocation2 + $0x8] sm:$0xff]
    %v31 = vld [vmem:[#allocation2 + $0x10] sm:$0xff]
    %v32 = vld [vmem:[#allocation2 + $0x18] sm:$0xff]
    %v33 = vld [vmem:[#allocation2 + $0x20] sm:$0xff]
    %v34 = vld [vmem:[#allocation2 + $0x28] sm:$0xff]
    %v35 = vld [vmem:[#allocation2 + $0x30] sm:$0xff]
    %v36 = vld [vmem:[#allocation2 + $0x38] sm:$0xff]
    %v37 = vld [vmem:[#allocation2 + $0x40] sm:$0xff]
    %v38 = vld [vmem:[#allocation2 + $0x48] sm:$0xff]
    %v39 = vld [vmem:[#allocation2 + $0x50] sm:$0xff]
    %v40 = vld [vmem:[#allocation2 + $0x58] sm:$0xff]
    %v41 = vld [vmem:[#allocation2 + $0x60] sm:$0xff]
    %v42 = vld [vmem:[#allocation2 + $0x68] sm:$0xff]
    %v43 = vld [vmem:[#allocation2 + $0x70] sm:$0xff]
    %v44 = vld [vmem:[#allocation2 + $0x78] sm:$0xff]
    %v45 = vld [vmem:[%s1] sm:$0x3]
    %v46 = vld [vmem:[%s2] sm:$0xff]
    %v47 = vld [vmem:[%s2 + $0x8] sm:$0xff]
    %v48 = vld [vmem:[%s2 + $0x10] sm:$0xff]
    %v49 = vld [vmem:[%s2 + $0x18] sm:$0xff]
    %v50 = vmax.f32 %v29, %v30
    %51 = vmax.xlane.f32.xlu0 %v50
    %v52 = vpop.xlane.xlu0 %51
    %v53 = vmax.f32 %v31, %v32
    %54 = vmax.xlane.f32.xlu0 %v53
    %v55 = vpop.xlane.xlu0 %54
    %v56 = vmax.f32 %v33, %v34
    %57 = vmax.xlane.f32.xlu0 %v56
    %v58 = vpop.xlane.xlu0 %57
    %v59 = vmax.f32 %v35, %v36
    %60 = vmax.xlane.f32.xlu0 %v59
    %v61 = vpop.xlane.xlu0 %60
    %v62 = vmax.f32 %v37, %v38
    %63 = vmax.xlane.f32.xlu0 %v62
    %v64 = vpop.xlane.xlu0 %63
    %v65 = vmax.f32 %v39, %v40
    %66 = vmax.xlane.f32.xlu0 %v65
    %v67 = vpop.xlane.xlu0 %66
    %v68 = vmax.f32 %v41, %v42
    %69 = vmax.xlane.f32.xlu0 %v68
    %v70 = vpop.xlane.xlu0 %69
    %v71 = vmax.f32 %v43, %v44
    %72 = vmax.xlane.f32.xlu0 %v71
    %v73 = vpop.xlane.xlu0 %72
    %v74 = vadd.f32 %v29, %v30
    %75 = vadd.xlane.f32.xlu0 %v74
    %v76 = vpop.xlane.xlu0 %75
    %v77 = vadd.f32 %v31, %v32
    %78 = vadd.xlane.f32.xlu0 %v77
    %v79 = vpop.xlane.xlu0 %78
    %v80 = vadd.f32 %v33, %v34
    %81 = vadd.xlane.f32.xlu0 %v80
    %v82 = vpop.xlane.xlu0 %81
    %v83 = vadd.f32 %v35, %v36
    %84 = vadd.xlane.f32.xlu0 %v83
    %v85 = vpop.xlane.xlu0 %84
    %v86 = vadd.f32 %v37, %v38
    %87 = vadd.xlane.f32.xlu0 %v86
    %v88 = vpop.xlane.xlu0 %87
    %v89 = vadd.f32 %v39, %v40
    %90 = vadd.xlane.f32.xlu0 %v89
    %v91 = vpop.xlane.xlu0 %90
    %v92 = vadd.f32 %v41, %v42
    %93 = vadd.xlane.f32.xlu0 %v92
    %v94 = vpop.xlane.xlu0 %93
    %v95 = vadd.f32 %v43, %v44
    %96 = vadd.xlane.f32.xlu0 %v95
    %v97 = vpop.xlane.xlu0 %96
    %v98 = vmul.f32 %v76, 0.00390625
    %v99 = vmul.f32 %v79, 0.00390625
    %v100 = vmul.f32 %v82, 0.00390625
    %v101 = vmul.f32 %v85, 0.00390625
    %v102 = vmul.f32 %v88, 0.00390625
    %v103 = vmul.f32 %v91, 0.00390625
    %v104 = vmul.f32 %v94, 0.00390625
    %v105 = vmul.f32 %v97, 0.00390625
    %v106 = vlaneseq
    %v107 = vshrl.u32 %v106, 7
    %v108 = vsub.s32 0, %v107
    %v109 = vrot.slane %v45, %v108
    %112 = vbcast.lane.b32.xlu0 %v109, 256
    %v113 = vpop.permute.xlu0 %112
    %s115 = sor.u32 256, 8
    %116 = vbcast.lane.b32.xlu0 %v109, %s115
    %v117 = vpop.permute.xlu0 %116
    %s119 = sor.u32 256, 16
    %120 = vbcast.lane.b32.xlu0 %v109, %s119
    %v121 = vpop.permute.xlu0 %120
    %s123 = sor.u32 256, 24
    %124 = vbcast.lane.b32.xlu0 %v109, %s123
    %v125 = vpop.permute.xlu0 %124
    %v130 = vmul.f32 %v52, %v113
    %v131 = vmul.f32 %v55, %v117
    %v132 = vmul.f32 %v58, %v121
    %v133 = vmul.f32 %v61, %v125
    %v134 = vmul.f32 %v64, %v113
    %v135 = vmul.f32 %v67, %v117
    %v136 = vmul.f32 %v70, %v121
    %v137 = vmul.f32 %v73, %v125
    %146 = vset.pattern.permute.xlu0 0
    %147 = vperm.xlu0 %146, %v130
    %v148 = vpop.permute.xlu0 %147
    %149 = vset.pattern.permute.xlu0 0
    %150 = vperm.xlu0 %149, %v131
    %v151 = vpop.permute.xlu0 %150
    %152 = vset.pattern.permute.xlu0 0
    %153 = vperm.xlu0 %152, %v132
    %v154 = vpop.permute.xlu0 %153
    %155 = vset.pattern.permute.xlu0 0
    %156 = vperm.xlu0 %155, %v133
    %v157 = vpop.permute.xlu0 %156
    %158 = vset.pattern.permute.xlu0 0
    %159 = vperm.xlu0 %158, %v134
    %v160 = vpop.permute.xlu0 %159
    %161 = vset.pattern.permute.xlu0 0
    %162 = vperm.xlu0 %161, %v135
    %v163 = vpop.permute.xlu0 %162
    %164 = vset.pattern.permute.xlu0 0
    %165 = vperm.xlu0 %164, %v136
    %v166 = vpop.permute.xlu0 %165
    %167 = vset.pattern.permute.xlu0 0
    %168 = vperm.xlu0 %167, %v137
    %v169 = vpop.permute.xlu0 %168
    %v170 = vlaneseq
    %v171 = vand.u32 %v170, 127
    %v172 = vlaneseq
    %v173 = vshrl.u32 %v172, 7
    %v174 = vsub.s32 %v171, %v173
    %v175 = vrot.slane %v148, %v174
    %v176 = vadd.s32 %v171, 4294967288
    %v177 = vlaneseq
    %v178 = vshrl.u32 %v177, 7
    %v179 = vsub.s32 %v176, %v178
    %v180 = vrot.slane %v151, %v179
    %vm181 = vcmask 130112
    %v182 = vsel %vm181, %v180, %v175
    %v183 = vadd.s32 %v171, 4294967280
    %v184 = vlaneseq
    %v185 = vshrl.u32 %v184, 7
    %v186 = vsub.s32 %v183, %v185
    %v187 = vrot.slane %v154, %v186
    %vm188 = vcmask 195712
    %v189 = vsel %vm188, %v187, %v182
    %v190 = vadd.s32 %v171, 4294967272
    %v191 = vlaneseq
    %v192 = vshrl.u32 %v191, 7
    %v193 = vsub.s32 %v190, %v192
    %v194 = vrot.slane %v157, %v193
    %vm195 = vcmask 261312
    %v196 = vsel %vm195, %v194, %v189
    %v197 = vlaneseq
    %v198 = vshrl.u32 %v197, 7
    %v199 = vsub.s32 %v171, %v198
    %v200 = vrot.slane %v160, %v199
    %v201 = vlaneseq
    %v202 = vshrl.u32 %v201, 7
    %v203 = vsub.s32 %v176, %v202
    %v204 = vrot.slane %v163, %v203
    %v205 = vsel %vm181, %v204, %v200
    %v206 = vlaneseq
    %v207 = vshrl.u32 %v206, 7
    %v208 = vsub.s32 %v183, %v207
    %v209 = vrot.slane %v166, %v208
    %v210 = vsel %vm188, %v209, %v205
    %v211 = vlaneseq
    %v212 = vshrl.u32 %v211, 7
    %v213 = vsub.s32 %v190, %v212
    %v214 = vrot.slane %v169, %v213
    %v215 = vsel %vm195, %v214, %v210
    %vm216 = vcmask 1041409
    %v217 = vsel %vm216, %v215, %v196
    %vm219 = vcmask 254976
    %v220 = vsel %vm219, %v217, 0.0
    %221 = vadd.xlane.f32.xlu0 %v220
    %v222 = vpop.xlane.xlu0 %221
    %v223 = vmax.f32 %v222, 0.0
    %228 = vset.pattern.permute.xlu0 0
    %229 = vperm.xlu0 %228, %v46
    %v230 = vpop.permute.xlu0 %229
    %231 = vset.pattern.permute.xlu0 0
    %232 = vperm.xlu0 %231, %v47
    %v233 = vpop.permute.xlu0 %232
    %234 = vset.pattern.permute.xlu0 0
    %235 = vperm.xlu0 %234, %v48
    %v236 = vpop.permute.xlu0 %235
    %237 = vset.pattern.permute.xlu0 0
    %238 = vperm.xlu0 %237, %v49
    %v239 = vpop.permute.xlu0 %238
    %v240 = vlaneseq
    %v241 = vshrl.u32 %v240, 7
    %v242 = vsub.s32 %v171, %v241
    %v243 = vrot.slane %v230, %v242
    %v244 = vlaneseq
    %v245 = vshrl.u32 %v244, 7
    %v246 = vsub.s32 %v176, %v245
    %v247 = vrot.slane %v233, %v246
    %v248 = vsel %vm181, %v247, %v243
    %v249 = vlaneseq
    %v250 = vshrl.u32 %v249, 7
    %v251 = vsub.s32 %v183, %v250
    %v252 = vrot.slane %v236, %v251
    %v253 = vsel %vm188, %v252, %v248
    %v254 = vlaneseq
    %v255 = vshrl.u32 %v254, 7
    %v256 = vsub.s32 %v190, %v255
    %v257 = vrot.slane %v239, %v256
    %v258 = vsel %vm195, %v257, %v253
    %v260 = vmul.f32 %v223, %v258
    %v261 = vadd.f32 %v260, 0.0
    %v262 = vlaneseq
    %v263 = vshrl.u32 %v262, 7
    %v264 = vsub.s32 1, %v263
    %v265 = vrot.slane %v45, %v264
    %268 = vbcast.lane.b32.xlu0 %v265, 256
    %v269 = vpop.permute.xlu0 %268
    %s271 = sor.u32 256, 8
    %272 = vbcast.lane.b32.xlu0 %v265, %s271
    %v273 = vpop.permute.xlu0 %272
    %s275 = sor.u32 256, 16
    %276 = vbcast.lane.b32.xlu0 %v265, %s275
    %v277 = vpop.permute.xlu0 %276
    %s279 = sor.u32 256, 24
    %280 = vbcast.lane.b32.xlu0 %v265, %s279
    %v281 = vpop.permute.xlu0 %280
    %v286 = vmul.f32 %v52, %v269
    %v287 = vmul.f32 %v55, %v273
    %v288 = vmul.f32 %v58, %v277
    %v289 = vmul.f32 %v61, %v281
    %v290 = vmul.f32 %v64, %v269
    %v291 = vmul.f32 %v67, %v273
    %v292 = vmul.f32 %v70, %v277
    %v293 = vmul.f32 %v73, %v281
    %302 = vset.pattern.permute.xlu0 0
    %303 = vperm.xlu0 %302, %v286
    %v304 = vpop.permute.xlu0 %303
    %305 = vset.pattern.permute.xlu0 0
    %306 = vperm.xlu0 %305, %v287
    %v307 = vpop.permute.xlu0 %306
    %308 = vset.pattern.permute.xlu0 0
    %309 = vperm.xlu0 %308, %v288
    %v310 = vpop.permute.xlu0 %309
    %311 = vset.pattern.permute.xlu0 0
    %312 = vperm.xlu0 %311, %v289
    %v313 = vpop.permute.xlu0 %312
    %314 = vset.pattern.permute.xlu0 0
    %315 = vperm.xlu0 %314, %v290
    %v316 = vpop.permute.xlu0 %315
    %317 = vset.pattern.permute.xlu0 0
    %318 = vperm.xlu0 %317, %v291
    %v319 = vpop.permute.xlu0 %318
    %320 = vset.pattern.permute.xlu0 0
    %321 = vperm.xlu0 %320, %v292
    %v322 = vpop.permute.xlu0 %321
    %323 = vset.pattern.permute.xlu0 0
    %324 = vperm.xlu0 %323, %v293
    %v325 = vpop.permute.xlu0 %324
    %v326 = vlaneseq
    %v327 = vshrl.u32 %v326, 7
    %v328 = vsub.s32 %v171, %v327
    %v329 = vrot.slane %v304, %v328
    %v330 = vlaneseq
    %v331 = vshrl.u32 %v330, 7
    %v332 = vsub.s32 %v176, %v331
    %v333 = vrot.slane %v307, %v332
    %v334 = vsel %vm181, %v333, %v329
    %v335 = vlaneseq
    %v336 = vshrl.u32 %v335, 7
    %v337 = vsub.s32 %v183, %v336
    %v338 = vrot.slane %v310, %v337
    %v339 = vsel %vm188, %v338, %v334
    %v340 = vlaneseq
    %v341 = vshrl.u32 %v340, 7
    %v342 = vsub.s32 %v190, %v341
    %v343 = vrot.slane %v313, %v342
    %v344 = vsel %vm195, %v343, %v339
    %v345 = vlaneseq
    %v346 = vshrl.u32 %v345, 7
    %v347 = vsub.s32 %v171, %v346
    %v348 = vrot.slane %v316, %v347
    %v349 = vlaneseq
    %v350 = vshrl.u32 %v349, 7
    %v351 = vsub.s32 %v176, %v350
    %v352 = vrot.slane %v319, %v351
    %v353 = vsel %vm181, %v352, %v348
    %v354 = vlaneseq
    %v355 = vshrl.u32 %v354, 7
    %v356 = vsub.s32 %v183, %v355
    %v357 = vrot.slane %v322, %v356
    %v358 = vsel %vm188, %v357, %v353
    %v359 = vlaneseq
    %v360 = vshrl.u32 %v359, 7
    %v361 = vsub.s32 %v190, %v360
    %v362 = vrot.slane %v325, %v361
    %v363 = vsel %vm195, %v362, %v358
    %v364 = vsel %vm216, %v363, %v344
    %v366 = vsel %vm219, %v364, 0.0
    %367 = vadd.xlane.f32.xlu0 %v366
    %v368 = vpop.xlane.xlu0 %367
    %v369 = vmax.f32 %v368, 0.0
    %370 = vset.pattern.permute.xlu0 1
    %371 = vperm.xlu0 %370, %v46
    %v372 = vpop.permute.xlu0 %371
    %373 = vset.pattern.permute.xlu0 1
    %374 = vperm.xlu0 %373, %v47
    %v375 = vpop.permute.xlu0 %374
    %376 = vset.pattern.permute.xlu0 1
    %377 = vperm.xlu0 %376, %v48
    %v378 = vpop.permute.xlu0 %377
    %379 = vset.pattern.permute.xlu0 1
    %380 = vperm.xlu0 %379, %v49
    %v381 = vpop.permute.xlu0 %380
    %v382 = vlaneseq
    %v383 = vshrl.u32 %v382, 7
    %v384 = vsub.s32 %v171, %v383
    %v385 = vrot.slane %v372, %v384
    %v386 = vlaneseq
    %v387 = vshrl.u32 %v386, 7
    %v388 = vsub.s32 %v176, %v387
    %v389 = vrot.slane %v375, %v388
    %v390 = vsel %vm181, %v389, %v385
    %v391 = vlaneseq
    %v392 = vshrl.u32 %v391, 7
    %v393 = vsub.s32 %v183, %v392
    %v394 = vrot.slane %v378, %v393
    %v395 = vsel %vm188, %v394, %v390
    %v396 = vlaneseq
    %v397 = vshrl.u32 %v396, 7
    %v398 = vsub.s32 %v190, %v397
    %v399 = vrot.slane %v381, %v398
    %v400 = vsel %vm195, %v399, %v395
    %v402 = vmul.f32 %v369, %v400
    %v403 = vadd.f32 %v261, %v402
    %v404 = vmul.f32 %v98, %v113
    %v405 = vmul.f32 %v99, %v117
    %v406 = vmul.f32 %v100, %v121
    %v407 = vmul.f32 %v101, %v125
    %v408 = vmul.f32 %v102, %v113
    %v409 = vmul.f32 %v103, %v117
    %v410 = vmul.f32 %v104, %v121
    %v411 = vmul.f32 %v105, %v125
    %420 = vset.pattern.permute.xlu0 0
    %421 = vperm.xlu0 %420, %v404
    %v422 = vpop.permute.xlu0 %421
    %423 = vset.pattern.permute.xlu0 0
    %424 = vperm.xlu0 %423, %v405
    %v425 = vpop.permute.xlu0 %424
    %426 = vset.pattern.permute.xlu0 0
    %427 = vperm.xlu0 %426, %v406
    %v428 = vpop.permute.xlu0 %427
    %429 = vset.pattern.permute.xlu0 0
    %430 = vperm.xlu0 %429, %v407
    %v431 = vpop.permute.xlu0 %430
    %432 = vset.pattern.permute.xlu0 0
    %433 = vperm.xlu0 %432, %v408
    %v434 = vpop.permute.xlu0 %433
    %435 = vset.pattern.permute.xlu0 0
    %436 = vperm.xlu0 %435, %v409
    %v437 = vpop.permute.xlu0 %436
    %438 = vset.pattern.permute.xlu0 0
    %439 = vperm.xlu0 %438, %v410
    %v440 = vpop.permute.xlu0 %439
    %441 = vset.pattern.permute.xlu0 0
    %442 = vperm.xlu0 %441, %v411
    %v443 = vpop.permute.xlu0 %442
    %v444 = vlaneseq
    %v445 = vshrl.u32 %v444, 7
    %v446 = vsub.s32 %v171, %v445
    %v447 = vrot.slane %v422, %v446
    %v448 = vlaneseq
    %v449 = vshrl.u32 %v448, 7
    %v450 = vsub.s32 %v176, %v449
    %v451 = vrot.slane %v425, %v450
    %v452 = vsel %vm181, %v451, %v447
    %v453 = vlaneseq
    %v454 = vshrl.u32 %v453, 7
    %v455 = vsub.s32 %v183, %v454
    %v456 = vrot.slane %v428, %v455
    %v457 = vsel %vm188, %v456, %v452
    %v458 = vlaneseq
    %v459 = vshrl.u32 %v458, 7
    %v460 = vsub.s32 %v190, %v459
    %v461 = vrot.slane %v431, %v460
    %v462 = vsel %vm195, %v461, %v457
    %v463 = vlaneseq
    %v464 = vshrl.u32 %v463, 7
    %v465 = vsub.s32 %v171, %v464
    %v466 = vrot.slane %v434, %v465
    %v467 = vlaneseq
    %v468 = vshrl.u32 %v467, 7
    %v469 = vsub.s32 %v176, %v468
    %v470 = vrot.slane %v437, %v469
    %v471 = vsel %vm181, %v470, %v466
    %v472 = vlaneseq
    %v473 = vshrl.u32 %v472, 7
    %v474 = vsub.s32 %v183, %v473
    %v475 = vrot.slane %v440, %v474
    %v476 = vsel %vm188, %v475, %v471
    %v477 = vlaneseq
    %v478 = vshrl.u32 %v477, 7
    %v479 = vsub.s32 %v190, %v478
    %v480 = vrot.slane %v443, %v479
    %v481 = vsel %vm195, %v480, %v476
    %v482 = vsel %vm216, %v481, %v462
    %v484 = vsel %vm219, %v482, 0.0
    %485 = vadd.xlane.f32.xlu0 %v484
    %v486 = vpop.xlane.xlu0 %485
    %v487 = vmax.f32 %v486, 0.0
    %v488 = vmul.f32 %v487, %v258
    %v489 = vadd.f32 %v488, 0.0
    %v490 = vmul.f32 %v98, %v269
    %v491 = vmul.f32 %v99, %v273
    %v492 = vmul.f32 %v100, %v277
    %v493 = vmul.f32 %v101, %v281
    %v494 = vmul.f32 %v102, %v269
    %v495 = vmul.f32 %v103, %v273
    %v496 = vmul.f32 %v104, %v277
    %v497 = vmul.f32 %v105, %v281
    %506 = vset.pattern.permute.xlu0 0
    %507 = vperm.xlu0 %506, %v490
    %v508 = vpop.permute.xlu0 %507
    %509 = vset.pattern.permute.xlu0 0
    %510 = vperm.xlu0 %509, %v491
    %v511 = vpop.permute.xlu0 %510
    %512 = vset.pattern.permute.xlu0 0
    %513 = vperm.xlu0 %512, %v492
    %v514 = vpop.permute.xlu0 %513
    %515 = vset.pattern.permute.xlu0 0
    %516 = vperm.xlu0 %515, %v493
    %v517 = vpop.permute.xlu0 %516
    %518 = vset.pattern.permute.xlu0 0
    %519 = vperm.xlu0 %518, %v494
    %v520 = vpop.permute.xlu0 %519
    %521 = vset.pattern.permute.xlu0 0
    %522 = vperm.xlu0 %521, %v495
    %v523 = vpop.permute.xlu0 %522
    %524 = vset.pattern.permute.xlu0 0
    %525 = vperm.xlu0 %524, %v496
    %v526 = vpop.permute.xlu0 %525
    %527 = vset.pattern.permute.xlu0 0
    %528 = vperm.xlu0 %527, %v497
    %v529 = vpop.permute.xlu0 %528
    %v530 = vlaneseq
    %v531 = vshrl.u32 %v530, 7
    %v532 = vsub.s32 %v171, %v531
    %v533 = vrot.slane %v508, %v532
    %v534 = vlaneseq
    %v535 = vshrl.u32 %v534, 7
    %v536 = vsub.s32 %v176, %v535
    %v537 = vrot.slane %v511, %v536
    %v538 = vsel %vm181, %v537, %v533
    %v539 = vlaneseq
    %v540 = vshrl.u32 %v539, 7
    %v541 = vsub.s32 %v183, %v540
    %v542 = vrot.slane %v514, %v541
    %v543 = vsel %vm188, %v542, %v538
    %v544 = vlaneseq
    %v545 = vshrl.u32 %v544, 7
    %v546 = vsub.s32 %v190, %v545
    %v547 = vrot.slane %v517, %v546
    %v548 = vsel %vm195, %v547, %v543
    %v549 = vlaneseq
    %v550 = vshrl.u32 %v549, 7
    %v551 = vsub.s32 %v171, %v550
    %v552 = vrot.slane %v520, %v551
    %v553 = vlaneseq
    %v554 = vshrl.u32 %v553, 7
    %v555 = vsub.s32 %v176, %v554
    %v556 = vrot.slane %v523, %v555
    %v557 = vsel %vm181, %v556, %v552
    %v558 = vlaneseq
    %v559 = vshrl.u32 %v558, 7
    %v560 = vsub.s32 %v183, %v559
    %v561 = vrot.slane %v526, %v560
    %v562 = vsel %vm188, %v561, %v557
    %v563 = vlaneseq
    %v564 = vshrl.u32 %v563, 7
    %v565 = vsub.s32 %v190, %v564
    %v566 = vrot.slane %v529, %v565
    %v567 = vsel %vm195, %v566, %v562
    %v568 = vsel %vm216, %v567, %v548
    %v570 = vsel %vm219, %v568, 0.0
    %571 = vadd.xlane.f32.xlu0 %v570
    %v572 = vpop.xlane.xlu0 %571
    %v573 = vmax.f32 %v572, 0.0
    %v574 = vmul.f32 %v573, %v400
    %v575 = vadd.f32 %v489, %v574
    %v576 = vadd.f32 %v403, %v575
    %v577 = vxor.u32 %v576, 2147483648
    %v578 = vmul.f32 %v577, 1.442695
    %v579 = vpow.pop %v578
    %v580 = vadd.f32 %v579, 1.0
    %v581 = vrcp.pop %v580
    %v582 = vmul.f32 1.0, %v581
    %v583 = vlaneseq
    %v584 = vshrl.u32 %v583, 7
    %v585 = vsub.s32 0, %v584
    %v586 = vrot.slane %v582, %v585
    %588 = vbcast.lane.b32.xlu0 %v586, 256
    %v589 = vpop.permute.xlu0 %588
    %s591 = sor.u32 256, 8
    %592 = vbcast.lane.b32.xlu0 %v586, %s591
    %v593 = vpop.permute.xlu0 %592
    %s595 = sor.u32 256, 16
    %596 = vbcast.lane.b32.xlu0 %v586, %s595
    %v597 = vpop.permute.xlu0 %596
    %s599 = sor.u32 256, 24
    %600 = vbcast.lane.b32.xlu0 %v586, %s599
    %v601 = vpop.permute.xlu0 %600
    %v602 = vlaneseq
    %v603 = vshrl.u32 %v602, 7
    %v604 = vsub.s32 1, %v603
    %v605 = vrot.slane %v582, %v604
    %607 = vbcast.lane.b32.xlu0 %v605, 256
    %v608 = vpop.permute.xlu0 %607
    %s610 = sor.u32 256, 8
    %611 = vbcast.lane.b32.xlu0 %v605, %s610
    %v612 = vpop.permute.xlu0 %611
    %s614 = sor.u32 256, 16
    %615 = vbcast.lane.b32.xlu0 %v605, %s614
    %v616 = vpop.permute.xlu0 %615
    %s618 = sor.u32 256, 24
    %619 = vbcast.lane.b32.xlu0 %v605, %s618
    %v620 = vpop.permute.xlu0 %619
    %v621 = vmul.f32 %v29, %v589
    %v622 = vmul.f32 %v30, %v589
    %v623 = vmul.f32 %v31, %v593
    %v624 = vmul.f32 %v32, %v593
    %v625 = vmul.f32 %v33, %v597
    %v626 = vmul.f32 %v34, %v597
    %v627 = vmul.f32 %v35, %v601
    %v628 = vmul.f32 %v36, %v601
    %v629 = vmul.f32 %v37, %v608
    %v630 = vmul.f32 %v38, %v608
    %v631 = vmul.f32 %v39, %v612
    %v632 = vmul.f32 %v40, %v612
    %v633 = vmul.f32 %v41, %v616
    %v634 = vmul.f32 %v42, %v616
    %v635 = vmul.f32 %v43, %v620
    %v636 = vmul.f32 %v44, %v620
    %637 = vst [vmem:[#allocation5] sm:$0xff] %v621
    %638 = vst [vmem:[#allocation5 + $0x8] sm:$0xff] %v622
    %639 = vst [vmem:[#allocation5 + $0x10] sm:$0xff] %v623
    %640 = vst [vmem:[#allocation5 + $0x18] sm:$0xff] %v624
    %641 = vst [vmem:[#allocation5 + $0x20] sm:$0xff] %v625
    %642 = vst [vmem:[#allocation5 + $0x28] sm:$0xff] %v626
    %643 = vst [vmem:[#allocation5 + $0x30] sm:$0xff] %v627
    %644 = vst [vmem:[#allocation5 + $0x38] sm:$0xff] %v628
    %645 = vst [vmem:[#allocation5 + $0x40] sm:$0xff] %v629
    %646 = vst [vmem:[#allocation5 + $0x48] sm:$0xff] %v630
    %647 = vst [vmem:[#allocation5 + $0x50] sm:$0xff] %v631
    %648 = vst [vmem:[#allocation5 + $0x58] sm:$0xff] %v632
    %649 = vst [vmem:[#allocation5 + $0x60] sm:$0xff] %v633
    %650 = vst [vmem:[#allocation5 + $0x68] sm:$0xff] %v634
    %651 = vst [vmem:[#allocation5 + $0x70] sm:$0xff] %v635
    %652 = vst [vmem:[#allocation5 + $0x78] sm:$0xff] %v636
    // Predicated region
    $region18: #{tpu_custom_call.1} parent=1 // pred_check
      _
    $region19: #{tpu_custom_call.1} parent=1 // pred_check_branch
      %654 = sbr.rel (0) target = $region21
    $region20: #{tpu_custom_call.1} parent=1 // pred_region
      %s656 = ssub.s32 2048, 2048
      %657 = vsyncadd [#allocation4], %s656
      %s658 = sshll.u32 [#allocation5], 4
      %s659 = int_to_ptr.vmem [resolvable:$true] %s658
      %664 = dma.vmem_to_hbm [thread:$0]  %s659, 2048, %s3, [#allocation4], 256, 256, 16
    $region21: #{tpu_custom_call.1} parent=1 // pred_fallthru
      _
    // Predicated region
    $region22: #{tpu_custom_call.1} parent=1 // pred_check
      _
    $region23: #{tpu_custom_call.1} parent=1 // pred_check_branch
      %666 = sbr.rel (0) target = $region25
    $region24: #{tpu_custom_call.1} parent=1 // pred_region
      %667 = dma.done [#allocation4], 2048
    $region25: #{tpu_custom_call.1} parent=1 // pred_fallthru
      _
    %668 = vsyncpa [#allocation3], 1
    %669 = vsyncpa [#allocation4], 1

</llo_original>
